<compile_context>
chip_gen: v7x
topology: tpu7x:2x2x1
jax: 0.10.0
libtpu: 0.0.40
codegen_flags: <defaults>
</compile_context>

<pallas_src>
import jax
import jax.numpy as jnp
from jax.experimental import pallas as pl
from jax.experimental.pallas import tpu as pltpu

_SUBLANE = 8


def _round_up(x: int, m: int) -> int:
    return (x + m - 1) // m * m


def _vmem_capacity_bytes() -> int:
    try:
        info = pltpu.get_tpu_info()
        cap = getattr(info, "vmem_capacity_bytes", None)
        if cap:
            return int(cap)
    except Exception:
        pass
    return 64 * 1024 * 1024  # conservative default (v7x per-TC VMEM)


def _mlp_kernel(x_ref, w1_ref, b1_ref, w2_ref, b2_ref, o_ref):
    # fc1 + ReLU + fc2 on the current batch tile; f32 accumulation on the MXU.
    x = x_ref[...]
    h = jnp.dot(x, w1_ref[...], preferred_element_type=jnp.float32)
    h = jnp.maximum(h + b1_ref[...].astype(jnp.float32), 0.0)
    out = jnp.dot(h.astype(x.dtype), w2_ref[...], preferred_element_type=jnp.float32)
    out = out + b2_ref[...].astype(jnp.float32)
    o_ref[...] = out.astype(o_ref.dtype)


def complex_probe_forward(x, w1, b1, w2, b2, *, batch_tile=None,
                          allow_xla_fallback=False):
    """relu(x @ w1 + b1) @ w2 + b2  (== ComplexProbe.forward)."""
    B, D_in = x.shape
    H = w1.shape[1]
    C = w2.shape[1]
    assert w1.shape == (D_in, H) and w2.shape == (H, C)

    dtype = x.dtype
    itemsize = jnp.dtype(dtype).itemsize
    # These casts are no-ops when params are already in the compute dtype
    # (pre-cast them once at init for bf16 inference to keep the per-call
    # wrapper free of extra XLA passes).
    w1 = w1.astype(dtype)
    w2 = w2.astype(dtype)
    b1 = jnp.reshape(b1, (1, H)).astype(dtype)
    b2 = jnp.reshape(b2, (1, C)).astype(dtype)

    if allow_xla_fallback and B <= 128:
        # Tiny batches: custom-call launch overhead dominates; XLA's fused
        # matmul path is already at roofline for these sizes.
        return jnp.maximum(x @ w1 + b1, 0.0) @ w2 + b2

    vmem_cap = _vmem_capacity_bytes()
    budget = int(0.6 * vmem_cap)  # ~38 MiB on v7x, ~76 MiB on v5e/v6e

    def footprint(tb):
        # Double-buffered resident weights/biases (Pallas allocates 2 buffers
        # per input by default) + double-buffered x / out tiles + f32 hidden
        # activations (and their compute-dtype copy for the second matmul).
        weights = 2 * (D_in * H + H + H * C + C) * itemsize
        io = 2 * tb * D_in * itemsize + 2 * tb * C * itemsize
        hidden = tb * H * (4 + itemsize)
        return weights + io + hidden

    if batch_tile is None:
        tb = min(8192, _round_up(B, _SUBLANE))
        # Keep >=2 grid steps for large batches so the "parallel" batch axis
        # actually shards across v7x's two TensorCores.
        if B >= 1024:
            tb = min(tb, _round_up(pl.cdiv(B, 2), _SUBLANE))
    else:
        tb = _round_up(int(batch_tile), _SUBLANE)
    # Shrink (including user-supplied tiles) until the pipeline fits VMEM.
    while tb > _SUBLANE and footprint(tb) > budget:
        tb //= 2
    tb = max(_SUBLANE, _round_up(tb, _SUBLANE))

    # Pad only the batch so every grid step is full; feature dims stay exact.
    Bp = _round_up(B, tb)
    grid = (Bp // tb,)
    xp = x if Bp == B else jnp.pad(x, ((0, Bp - B), (0, 0)))

    vmem_limit = int(min(max(footprint(tb) + (4 << 20), 32 << 20),
                         int(0.8 * vmem_cap)))

    cost = pl.CostEstimate(
        flops=2 * B * (D_in * H + H * C),
        transcendentals=0,
        bytes_accessed=(B * (D_in + C) + D_in * H + H + H * C + C) * itemsize,
    )

    out = pl.pallas_call(
        _mlp_kernel,
        out_shape=jax.ShapeDtypeStruct((Bp, C), dtype),
        grid_spec=pltpu.PrefetchScalarGridSpec(
            num_scalar_prefetch=0,
            grid=grid,
            in_specs=[
                pl.BlockSpec((tb, D_in), lambda i: (i, 0)),  # x: tiled over batch
                pl.BlockSpec((D_in, H), lambda i: (0, 0)),   # w1: resident
                pl.BlockSpec((1, H), lambda i: (0, 0)),      # b1: resident
                pl.BlockSpec((H, C), lambda i: (0, 0)),      # w2: resident
                pl.BlockSpec((1, C), lambda i: (0, 0)),      # b2: resident
            ],
            out_specs=pl.BlockSpec((tb, C), lambda i: (i, 0)),
        ),
        compiler_params=pltpu.CompilerParams(
            dimension_semantics=("parallel",),
            vmem_limit_bytes=vmem_limit,
        ),
        cost_estimate=cost,
    )(xp, w1, b1, w2, b2)

    # Drop batch padding only (feature dims were never padded).
    return out if Bp == B else out[:B]


def _reference(x, w1, b1, w2, b2):
    return jnp.maximum(x @ w1 + b1.reshape(1, -1), 0.0) @ w2 + b2.reshape(1, -1)


if __name__ == "__main__":
    # Small shapes consistent with the module:
    # Linear(input_dim, hidden) -> ReLU -> Linear(hidden, num_classes)
    input_dim, hidden_dim, num_classes = 32, 64, 8

    key = jax.random.PRNGKey(0)
    kx, kw1, kb1, kw2, kb2, kx2, kx3 = jax.random.split(key, 7)

    # PyTorch-style uniform init bounds (1/sqrt(fan_in)).
    bound1 = 1.0 / (input_dim ** 0.5)
    w1 = jax.random.uniform(kw1, (input_dim, hidden_dim), jnp.float32, -bound1, bound1)
    b1 = jax.random.uniform(kb1, (1, hidden_dim), jnp.float32, -bound1, bound1)
    bound2 = 1.0 / (hidden_dim ** 0.5)
    w2 = jax.random.uniform(kw2, (hidden_dim, num_classes), jnp.float32, -bound2, bound2)
    b2 = jax.random.uniform(kb2, (1, num_classes), jnp.float32, -bound2, bound2)

    # Case 1: small batch, single grid step (default tile selection).
    B1 = 8
    x1 = jax.random.normal(kx, (B1, input_dim), dtype=jnp.float32)
    out1 = jax.block_until_ready(complex_probe_forward(x1, w1, b1, w2, b2))
    ref1 = _reference(x1, w1, b1, w2, b2)
    assert out1.shape == (B1, num_classes)
    assert jnp.allclose(out1, ref1, atol=1e-5, rtol=1e-5)

    # Case 2: multi-step batch grid (exercises pipelining / parallel axis).
    B2 = 64
    x2 = jax.random.normal(kx2, (B2, input_dim), dtype=jnp.float32)
    out2 = jax.block_until_ready(
        complex_probe_forward(x2, w1, b1, w2, b2, batch_tile=16))
    ref2 = _reference(x2, w1, b1, w2, b2)
    assert out2.shape == (B2, num_classes)
    assert jnp.allclose(out2, ref2, atol=1e-5, rtol=1e-5)

    # Case 3: batch not a multiple of the sublane width (exercises batch
    # padding + slice-back) in bf16 storage with f32 accumulation.
    B3 = 13
    x3 = jax.random.normal(kx3, (B3, input_dim), dtype=jnp.float32)
    out3 = jax.block_until_ready(
        complex_probe_forward(x3.astype(jnp.bfloat16),
                              w1.astype(jnp.bfloat16), b1.astype(jnp.bfloat16),
                              w2.astype(jnp.bfloat16), b2.astype(jnp.bfloat16)))
    ref3 = _reference(x3, w1, b1, w2, b2)
    assert out3.shape == (B3, num_classes)
    assert jnp.allclose(out3.astype(jnp.float32), ref3, atol=1e-1, rtol=5e-2)

    print("KERNEL_OK")
</pallas_src>

<mosaic_0001>
module attributes {stable_mosaic.version = 11 : i64} {
  func.func @_mlp_kernel(%arg0: i32, %arg1: memref<8x32xf32, #tpu.memory_space<vmem>>, %arg2: memref<32x64xf32, #tpu.memory_space<vmem>>, %arg3: memref<1x64xf32, #tpu.memory_space<vmem>>, %arg4: memref<64x8xf32, #tpu.memory_space<vmem>>, %arg5: memref<1x8xf32, #tpu.memory_space<vmem>>, %arg6: memref<8x8xf32, #tpu.memory_space<vmem>>) attributes {dimension_semantics = [#tpu.dimension_semantics<parallel>], iteration_bounds = array<i64: 1>, scalar_prefetch = 0 : i64, scratch_operands = 0 : i64, tpu.core_type = #tpu.core_type<tc>, window_params = [{transform_indices = @transform_0, window_bounds = array<i64: 8, 32>}, {pipeline_mode = #tpu.pipeline_mode<synchronous>, transform_indices = @transform_1, window_bounds = array<i64: 32, 64>}, {pipeline_mode = #tpu.pipeline_mode<synchronous>, transform_indices = @transform_2, window_bounds = array<i64: 1, 64>}, {pipeline_mode = #tpu.pipeline_mode<synchronous>, transform_indices = @transform_3, window_bounds = array<i64: 64, 8>}, {pipeline_mode = #tpu.pipeline_mode<synchronous>, transform_indices = @transform_4, window_bounds = array<i64: 1, 8>}, {transform_indices = @transform_5, window_bounds = array<i64: 8, 8>}]} {
    %c0 = arith.constant 0 : index
    %c0_0 = arith.constant 0 : index
    %0 = vector.load %arg1[%c0, %c0_0] : memref<8x32xf32, #tpu.memory_space<vmem>>, vector<8x32xf32>
    %c0_1 = arith.constant 0 : index
    %c0_2 = arith.constant 0 : index
    %1 = vector.load %arg2[%c0_1, %c0_2] : memref<32x64xf32, #tpu.memory_space<vmem>>, vector<32x64xf32>
    %cst = arith.constant dense<0.000000e+00> : vector<8x64xf32>
    %2 = tpu.matmul %0, %1, %cst {dimension_numbers = #tpu.dot_dimension_numbers<[1], [0], [0], [1], [0, 0, 1, 1], [], []>} : vector<8x32xf32>, vector<32x64xf32>, vector<8x64xf32> -> vector<8x64xf32>
    %c0_3 = arith.constant 0 : index
    %c0_4 = arith.constant 0 : index
    %3 = vector.load %arg3[%c0_3, %c0_4] : memref<1x64xf32, #tpu.memory_space<vmem>>, vector<1x64xf32>
    %4 = vector.broadcast %3 : vector<1x64xf32> to vector<8x64xf32>
    %5 = arith.addf %2, %4 : vector<8x64xf32>
    %cst_5 = arith.constant 0.000000e+00 : f32
    %6 = vector.broadcast %cst_5 : f32 to vector<8x64xf32>
    %7 = arith.maximumf %5, %6 : vector<8x64xf32>
    %c0_6 = arith.constant 0 : index
    %c0_7 = arith.constant 0 : index
    %8 = vector.load %arg4[%c0_6, %c0_7] : memref<64x8xf32, #tpu.memory_space<vmem>>, vector<64x8xf32>
    %cst_8 = arith.constant dense<0.000000e+00> : vector<8x8xf32>
    %9 = tpu.matmul %7, %8, %cst_8 {dimension_numbers = #tpu.dot_dimension_numbers<[1], [0], [0], [1], [0, 0, 1, 1], [], []>} : vector<8x64xf32>, vector<64x8xf32>, vector<8x8xf32> -> vector<8x8xf32>
    %c0_9 = arith.constant 0 : index
    %c0_10 = arith.constant 0 : index
    %10 = vector.load %arg5[%c0_9, %c0_10] : memref<1x8xf32, #tpu.memory_space<vmem>>, vector<1x8xf32>
    %11 = vector.broadcast %10 : vector<1x8xf32> to vector<8x8xf32>
    %12 = arith.addf %9, %11 : vector<8x8xf32>
    %c0_11 = arith.constant 0 : index
    %c0_12 = arith.constant 0 : index
    %13 = vector.load %arg6[%c0_11, %c0_12] : memref<8x8xf32, #tpu.memory_space<vmem>>, vector<8x8xf32>
    tpu.vector_store %arg6[%c0_11, %c0_12], %12 {strides = array<i32>} : memref<8x8xf32, #tpu.memory_space<vmem>>, vector<8x8xf32>,
    return
  }
  func.func @transform_0(%arg0: i32) -> (i32, i32) {
    %c0_i32 = arith.constant 0 : i32
    %c0_i32_0 = arith.constant 0 : i32
    return %arg0, %c0_i32 : i32, i32
  }
  func.func @transform_1(%arg0: i32) -> (i32, i32) {
    %c0_i32 = arith.constant 0 : i32
    %c0_i32_0 = arith.constant 0 : i32
    %c0_i32_1 = arith.constant 0 : i32
    return %c0_i32, %c0_i32_0 : i32, i32
  }
  func.func @transform_2(%arg0: i32) -> (i32, i32) {
    %c0_i32 = arith.constant 0 : i32
    %c0_i32_0 = arith.constant 0 : i32
    %c0_i32_1 = arith.constant 0 : i32
    return %c0_i32, %c0_i32_0 : i32, i32
  }
  func.func @transform_3(%arg0: i32) -> (i32, i32) {
    %c0_i32 = arith.constant 0 : i32
    %c0_i32_0 = arith.constant 0 : i32
    %c0_i32_1 = arith.constant 0 : i32
    return %c0_i32, %c0_i32_0 : i32, i32
  }
  func.func @transform_4(%arg0: i32) -> (i32, i32) {
    %c0_i32 = arith.constant 0 : i32
    %c0_i32_0 = arith.constant 0 : i32
    %c0_i32_1 = arith.constant 0 : i32
    return %c0_i32, %c0_i32_0 : i32, i32
  }
  func.func @transform_5(%arg0: i32) -> (i32, i32) {
    %c0_i32 = arith.constant 0 : i32
    %c0_i32_0 = arith.constant 0 : i32
    return %arg0, %c0_i32 : i32, i32
  }
}

</mosaic_0001>

<llo_original>
// kernel: tpu_custom_call.1
$region0: #{tpu_custom_call.1}
  #allocation0 [shape = 'u32[]', space=smem, size = 0x4, offset = 0x4, fixed_abs, tag = 'smem constant byte address 0x4 - core index']
  #allocation1 [shape = 'u32[144,128]{1,0:T(1,128)}', space=vmem, size = 0x12000, scoped, tag = 'internal scratch']
  %s0 = inlined_call_operand.vmem [shape: f32[8,32], index: 0, kind: input, shape index: {}]
  %s1 = inlined_call_operand.vmem [shape: f32[32,64], index: 1, kind: input, shape index: {}]
  %s2 = inlined_call_operand.vmem [shape: f32[1,64], index: 2, kind: input, shape index: {}]
  %s3 = inlined_call_operand.vmem [shape: f32[64,8], index: 3, kind: input, shape index: {}]
  %s4 = inlined_call_operand.vmem [shape: f32[1,8], index: 4, kind: input, shape index: {}]
  %s5 = inlined_call_operand.hbm [shape: f32[8,8], index: 5, kind: output, shape index: {}]
  %s6 = sld [smem:[#allocation0]]
  $region30: #{tpu_custom_call.1} parent=0
    _
  %s8 = ssub.s32 1, %s6
  %s9 = scalar_select 0, %s8, %s6
  $region1: #{tpu_custom_call.1} parent=0
    #allocation2 [shape = 'u8[4096]{0}', space=vmem, size = 0x1000, scoped, tag = 'output window, operand 0, single buffered']
    #allocation3 [shape = 's32[1]{0}', space=sflag, size = 0x4, scoped, tag = 'scoped memory for tpu_custom_call.1']
    %10 = vsyncpa [#allocation3], 0
    // Predicated region
    $region2: #{tpu_custom_call.1} parent=1 // pred_check
      _
    $region3: #{tpu_custom_call.1} parent=1 // pred_check_branch
      %12 = sbr.rel (0) target = $region5
    $region4: #{tpu_custom_call.1} parent=1 // pred_region
      _
    $region5: #{tpu_custom_call.1} parent=1 // pred_fallthru
      _
    // Predicated region
    $region6: #{tpu_custom_call.1} parent=1 // pred_check
      _
    $region7: #{tpu_custom_call.1} parent=1 // pred_check_branch
      %14 = sbr.rel (0) target = $region9
    $region8: #{tpu_custom_call.1} parent=1 // pred_region
      _
    $region9: #{tpu_custom_call.1} parent=1 // pred_fallthru
      _
    // Predicated region
    $region10: #{tpu_custom_call.1} parent=1 // pred_check
      _
    $region11: #{tpu_custom_call.1} parent=1 // pred_check_branch
      %16 = sbr.rel (0) target = $region13
    $region12: #{tpu_custom_call.1} parent=1 // pred_region
      _
    $region13: #{tpu_custom_call.1} parent=1 // pred_fallthru
      _
    // Predicated region
    $region14: #{tpu_custom_call.1} parent=1 // pred_check
      _
    $region15: #{tpu_custom_call.1} parent=1 // pred_check_branch
      %18 = sbr.rel (0) target = $region17
    $region16: #{tpu_custom_call.1} parent=1 // pred_region
      _
    $region17: #{tpu_custom_call.1} parent=1 // pred_fallthru
      _
    // Predicated region
    $region18: #{tpu_custom_call.1} parent=1 // pred_check
      _
    $region19: #{tpu_custom_call.1} parent=1 // pred_check_branch
      %20 = sbr.rel (0) target = $region21
    $region20: #{tpu_custom_call.1} parent=1 // pred_region
      _
    $region21: #{tpu_custom_call.1} parent=1 // pred_fallthru
      _
    %v21 = vld [vmem:[%s0] sm:$0xff]
    %v22 = vld [vmem:[%s1] sm:$0xff]
    %v23 = vld [vmem:[%s1 + $0x8] sm:$0xff]
    %v24 = vld [vmem:[%s1 + $0x10] sm:$0xff]
    %v25 = vld [vmem:[%s1 + $0x18] sm:$0xff]
    %v26 = vld [vmem:[%s2] sm:$0x1]
    %v28 = vlaneseq
    %v29 = vshrl.u32 %v28, 7
    %v30 = vsub.s32 0, %v29
    %v31 = vrot.slane %v26, %v30
    %vm33 = vcmask 261120
    %v35 = vsel %vm33, %v21, 0
    %37 = vmatprep.subr.mxu0 0.0
    %38 = vmatpush1.msra.mxu0 %v22
    %39 = vmatprep.subr.mxu0 0.0
    %40 = vmatpush1.msra.mxu0 %v23
    %41 = vmatprep.subr.mxu0 0.0
    %42 = vmatpush1.msra.mxu0 %v24
    %43 = vmatprep.subr.mxu0 0.0
    %44 = vmatpush1.msra.mxu0 %v25
    %45 = vmatprep.subr.mxu0 0.0
    %46 = vmatpush1.msra.mxu0 0.0
    %47 = vmatprep.subr.mxu0 0.0
    %48 = vmatpush1.msra.mxu0 0.0
    %49 = vmatprep.subr.mxu0 0.0
    %50 = vmatpush1.msra.mxu0 0.0
    %51 = vmatprep.subr.mxu0 0.0
    %52 = vmatpush1.msra.mxu0 0.0
    %53 = vmatprep.subr.mxu0 0.0
    %54 = vmatpush1.msra.mxu0 0.0
    %55 = vmatprep.subr.mxu0 0.0
    %56 = vmatpush1.msra.mxu0 0.0
    %57 = vmatprep.subr.mxu0 0.0
    %58 = vmatpush1.msra.mxu0 0.0
    %59 = vmatprep.subr.mxu0 0.0
    %60 = vmatpush1.msra.mxu0 0.0
    %61 = vmatprep.subr.mxu0 0.0
    %62 = vmatpush1.msra.mxu0 0.0
    %63 = vmatprep.subr.mxu0 0.0
    %64 = vmatpush1.msra.mxu0 0.0
    %65 = vmatprep.subr.mxu0 0.0
    %66 = vmatpush1.msra.mxu0 0.0
    %67 = vmatprep.subr.mxu0 0.0
    %68 = vmatpush1.msra.mxu0 0.0
    %69 = vmatprep.subr.mxu0 0.0
    %70 = vmatpush1.msra.mxu0 0.0
    %71 = vmatprep.subr.mxu0 0.0
    %72 = vmatpush1.msra.mxu0 0.0
    %73 = vmatprep.subr.mxu0 0.0
    %74 = vmatpush1.msra.mxu0 0.0
    %75 = vmatprep.subr.mxu0 0.0
    %76 = vmatpush1.msra.mxu0 0.0
    %77 = vmatprep.subr.mxu0 0.0
    %78 = vmatpush1.msra.mxu0 0.0
    %79 = vmatprep.subr.mxu0 0.0
    %80 = vmatpush1.msra.mxu0 0.0
    %81 = vmatprep.subr.mxu0 0.0
    %82 = vmatpush1.msra.mxu0 0.0
    %83 = vmatprep.subr.mxu0 0.0
    %84 = vmatpush1.msra.mxu0 0.0
    %85 = vmatprep.subr.mxu0 0.0
    %86 = vmatpush1.msra.mxu0 0.0
    %87 = vmatprep.subr.mxu0 0.0
    %88 = vmatpush1.msra.mxu0 0.0
    %89 = vmatprep.subr.mxu0 0.0
    %90 = vmatpush1.msra.mxu0 0.0
    %91 = vmatprep.subr.mxu0 0.0
    %92 = vmatpush1.msra.mxu0 0.0
    %93 = vmatprep.subr.mxu0 0.0
    %94 = vmatpush1.msra.mxu0 0.0
    %95 = vmatprep.subr.mxu0 0.0
    %96 = vmatpush1.msra.mxu0 0.0
    %97 = vmatprep.subr.mxu0 0.0
    %98 = vmatpush1.msra.mxu0 0.0
    %99 = vmatprep.subr.mxu0 0.0
    %100 = vmatpush1.msra.mxu0 0.0
    %101 = vmatprep.mubr.f32.mxu0 0.0
    %102 = vmatmul.mubr.f32.gmra.mrb[0].mxu0 %v35
    %v103 = vpop.f32.mrb[0].mxu0
    %v104 = vadd.f32 %v31, %v103
    %v105 = vpop.f32.mrb[0].mxu0
    %106 = vdwg.mxu0
    %v107 = vmax.f32 %v104, 0.0
    %v108 = vld [vmem:[%s3] sm:$0xff]
    %v109 = vld [vmem:[%s3 + $0x8] sm:$0xff]
    %v110 = vld [vmem:[%s3 + $0x10] sm:$0xff]
    %v111 = vld [vmem:[%s3 + $0x18] sm:$0xff]
    %v112 = vld [vmem:[%s3 + $0x20] sm:$0xff]
    %v113 = vld [vmem:[%s3 + $0x28] sm:$0xff]
    %v114 = vld [vmem:[%s3 + $0x30] sm:$0xff]
    %v115 = vld [vmem:[%s3 + $0x38] sm:$0xff]
    %v116 = vld [vmem:[%s4] sm:$0x1]
    %v118 = vlaneseq
    %v119 = vshrl.u32 %v118, 7
    %v120 = vsub.s32 0, %v119
    %v121 = vrot.slane %v116, %v120
    %vm123 = vcmask 523264
    %v125 = vsel %vm123, %v107, 0
    %127 = vmatprep.subr.mxu0 0.0
    %128 = vmatpush1.msra.mxu0 %v108
    %129 = vmatprep.subr.mxu0 0.0
    %130 = vmatpush1.msra.mxu0 %v109
    %131 = vmatprep.subr.mxu0 0.0
    %132 = vmatpush1.msra.mxu0 %v110
    %133 = vmatprep.subr.mxu0 0.0
    %134 = vmatpush1.msra.mxu0 %v111
    %135 = vmatprep.subr.mxu0 0.0
    %136 = vmatpush1.msra.mxu0 %v112
    %137 = vmatprep.subr.mxu0 0.0
    %138 = vmatpush1.msra.mxu0 %v113
    %139 = vmatprep.subr.mxu0 0.0
    %140 = vmatpush1.msra.mxu0 %v114
    %141 = vmatprep.subr.mxu0 0.0
    %142 = vmatpush1.msra.mxu0 %v115
    %143 = vmatprep.subr.mxu0 0.0
    %144 = vmatpush1.msra.mxu0 0.0
    %145 = vmatprep.subr.mxu0 0.0
    %146 = vmatpush1.msra.mxu0 0.0
    %147 = vmatprep.subr.mxu0 0.0
    %148 = vmatpush1.msra.mxu0 0.0
    %149 = vmatprep.subr.mxu0 0.0
    %150 = vmatpush1.msra.mxu0 0.0
    %151 = vmatprep.subr.mxu0 0.0
    %152 = vmatpush1.msra.mxu0 0.0
    %153 = vmatprep.subr.mxu0 0.0
    %154 = vmatpush1.msra.mxu0 0.0
    %155 = vmatprep.subr.mxu0 0.0
    %156 = vmatpush1.msra.mxu0 0.0
    %157 = vmatprep.subr.mxu0 0.0
    %158 = vmatpush1.msra.mxu0 0.0
    %159 = vmatprep.subr.mxu0 0.0
    %160 = vmatpush1.msra.mxu0 0.0
    %161 = vmatprep.subr.mxu0 0.0
    %162 = vmatpush1.msra.mxu0 0.0
    %163 = vmatprep.subr.mxu0 0.0
    %164 = vmatpush1.msra.mxu0 0.0
    %165 = vmatprep.subr.mxu0 0.0
    %166 = vmatpush1.msra.mxu0 0.0
    %167 = vmatprep.subr.mxu0 0.0
    %168 = vmatpush1.msra.mxu0 0.0
    %169 = vmatprep.subr.mxu0 0.0
    %170 = vmatpush1.msra.mxu0 0.0
    %171 = vmatprep.subr.mxu0 0.0
    %172 = vmatpush1.msra.mxu0 0.0
    %173 = vmatprep.subr.mxu0 0.0
    %174 = vmatpush1.msra.mxu0 0.0
    %175 = vmatprep.subr.mxu0 0.0
    %176 = vmatpush1.msra.mxu0 0.0
    %177 = vmatprep.subr.mxu0 0.0
    %178 = vmatpush1.msra.mxu0 0.0
    %179 = vmatprep.subr.mxu0 0.0
    %180 = vmatpush1.msra.mxu0 0.0
    %181 = vmatprep.subr.mxu0 0.0
    %182 = vmatpush1.msra.mxu0 0.0
    %183 = vmatprep.subr.mxu0 0.0
    %184 = vmatpush1.msra.mxu0 0.0
    %185 = vmatprep.subr.mxu0 0.0
    %186 = vmatpush1.msra.mxu0 0.0
    %187 = vmatprep.subr.mxu0 0.0
    %188 = vmatpush1.msra.mxu0 0.0
    %189 = vmatprep.subr.mxu0 0.0
    %190 = vmatpush1.msra.mxu0 0.0
    %191 = vmatprep.mubr.f32.mxu0 0.0
    %192 = vmatmul.mubr.f32.gmra.mrb[0].mxu0 %v125
    %v193 = vpop.f32.mrb[0].mxu0
    %v194 = vadd.f32 %v121, %v193
    %v195 = vpop.f32.mrb[0].mxu0
    %196 = vdwg.mxu0
    %vm197 = vcmask 64512
    %198 = vst.msk [vmem:[#allocation2] sm:$0xff] %vm197, %v194
    // Predicated region
    $region22: #{tpu_custom_call.1} parent=1 // pred_check
      _
    $region23: #{tpu_custom_call.1} parent=1 // pred_check_branch
      %200 = sbr.rel (0) target = $region25
    $region24: #{tpu_custom_call.1} parent=1 // pred_region
      %s202 = ssub.s32 128, 128
      %203 = vsyncadd [#allocation3], %s202
      %s205 = sshll.u32 [#allocation2], 4
      %s206 = int_to_ptr.vmem [resolvable:$true] %s205
      %208 = dma.vmem_to_hbm [thread:$0]  %s206, 128, %s5, [#allocation3]
    $region25: #{tpu_custom_call.1} parent=1 // pred_fallthru
      _
    // Predicated region
    $region26: #{tpu_custom_call.1} parent=1 // pred_check
      _
    $region27: #{tpu_custom_call.1} parent=1 // pred_check_branch
      %210 = sbr.rel (0) target = $region29
    $region28: #{tpu_custom_call.1} parent=1 // pred_region
      %211 = dma.done [#allocation3], 128
    $region29: #{tpu_custom_call.1} parent=1 // pred_fallthru
      _
    %212 = vsyncpa [#allocation3], 1

</llo_original>
